<compile_context>
chip_gen: v6e
topology: v6e:2x2x1
jax: 0.10.0
libtpu: 0.0.40
codegen_flags: <defaults>
</compile_context>

<pallas_src>
import functools

import jax
import jax.numpy as jnp
from jax.experimental import pallas as pl
from jax.experimental.pallas import tpu as pltpu

_NEG_BIG = -1e30  # finite "-inf" so masked entries underflow exp() without NaN hazards


def _round_up(x, m):
    return ((x + m - 1) // m) * m


def _nt_xent_kernel(zr_ref, zc_ref, o_ref, m_sc, l_sc, p_sc, *,
                    inv_temp, n_valid, half):
    """One (row-tile, col-tile) step of the online log-sum-exp over similarities."""
    i = pl.program_id(0)          # anchor-row tile
    k = pl.program_id(1)          # contrast-col tile (reduction axis)
    tq = zr_ref.shape[0]
    tk = zc_ref.shape[0]

    @pl.when(k == 0)
    def _():
        m_sc[...] = jnp.full_like(m_sc, _NEG_BIG)
        l_sc[...] = jnp.zeros_like(l_sc)
        p_sc[...] = jnp.zeros_like(p_sc)

    # Fold 1/temperature into the small anchor tile (O(tq*D), not O(tq*tk)).
    a = zr_ref[...] * inv_temp                         # [tq, D], input dtype
    b = zc_ref[...]                                    # [tk, D]
    # Contract feature dims of both operands directly -> MXU, no transpose/XLU.
    s = jax.lax.dot_general(a, b, (((1,), (1,)), ((), ())),
                            preferred_element_type=jnp.float32)   # [tq, tk] f32

    row_g = i * tq + jax.lax.broadcasted_iota(jnp.int32, (tq, tk), 0)
    col_g = k * tk + jax.lax.broadcasted_iota(jnp.int32, (tq, tk), 1)

    # Exclude self-similarity (j == i) and padded contrast columns.
    valid = (col_g != row_g) & (col_g < n_valid)
    s = jnp.where(valid, s, _NEG_BIG)

    # Positive logit: column (row + half) mod n_valid. Exactly one match globally.
    pair_g = jnp.where(row_g < half, row_g + half, row_g - half)
    p_sc[...] += jnp.sum(jnp.where(col_g == pair_g, s, 0.0), axis=1, keepdims=True)

    # Online log-sum-exp over all columns j != row.
    m_prev = m_sc[...]
    m_new = jnp.maximum(m_prev, jnp.max(s, axis=1, keepdims=True))
    l_sc[...] = (l_sc[...] * jnp.exp(m_prev - m_new)
                 + jnp.sum(jnp.exp(s - m_new), axis=1, keepdims=True))
    m_sc[...] = m_new

    @pl.when(k == pl.num_programs(1) - 1)
    def _():
        # per-row loss = logsumexp_{j != r} sim[r, j] - sim[r, pair(r)]
        o_ref[...] = m_sc[...] + jnp.log(l_sc[...]) - p_sc[...]


def nt_xent_loss(z_i, z_j, temperature, *, block_q=128, block_k=256):
    """JAX/Pallas equivalent of NT_Xent.forward (single device; world_size folded into batch)."""
    if z_i.ndim != 2 or z_i.shape != z_j.shape:
        raise ValueError("z_i and z_j must both be [batch, dim] with equal shapes")
    bsz, d = z_i.shape
    n = 2 * bsz
    half = bsz

    z = jnp.concatenate([z_i, z_j], axis=0)                       # [N, D]
    # Cosine-similarity normalization (wrapper glue, O(N*D)); keep input dtype so
    # bf16 features feed the MXU directly.
    z32 = z.astype(jnp.float32)
    norm = jnp.sqrt(jnp.sum(z32 * z32, axis=-1, keepdims=True))
    zn = (z32 / jnp.maximum(norm, 1e-8)).astype(z.dtype)

    # Tile sizes (clamped for small N, padded rows/cols are masked in-kernel).
    tq = min(block_q, _round_up(n, 8))
    tk = min(block_k, _round_up(n, 128))
    n_pad_r = _round_up(n, tq)
    n_pad_c = _round_up(n, tk)
    z_rows = jnp.pad(zn, ((0, n_pad_r - n), (0, 0)))
    z_cols = jnp.pad(zn, ((0, n_pad_c - n), (0, 0)))

    kernel = functools.partial(_nt_xent_kernel,
                               inv_temp=float(1.0 / temperature),
                               n_valid=n, half=half)

    row_losses = pl.pallas_call(
        kernel,
        out_shape=jax.ShapeDtypeStruct((n_pad_r, 1), jnp.float32),
        grid=(n_pad_r // tq, n_pad_c // tk),
        in_specs=[
            pl.BlockSpec((tq, d), lambda i, k: (i, 0)),   # anchor rows
            pl.BlockSpec((tk, d), lambda i, k: (k, 0)),   # contrast cols
        ],
        out_specs=pl.BlockSpec((tq, 1), lambda i, k: (i, 0)),
        scratch_shapes=[
            pltpu.VMEM((tq, 1), jnp.float32),   # running max m
            pltpu.VMEM((tq, 1), jnp.float32),   # running sum-exp l
            pltpu.VMEM((tq, 1), jnp.float32),   # positive logit
        ],
        compiler_params=pltpu.CompilerParams(
            dimension_semantics=("parallel", "arbitrary")),
    )(z_rows, z_cols)

    # CrossEntropyLoss(reduction='sum') over the N valid rows, divided by N.
    return jnp.sum(row_losses[:n, 0]) / n


def _nt_xent_ref(z_i, z_j, temperature):
    """Pure-JAX mirror of the PyTorch NT_Xent.forward for validation."""
    b, _ = z_i.shape
    n = 2 * b
    z = jnp.concatenate([z_i, z_j], axis=0).astype(jnp.float32)
    zn = z / jnp.maximum(jnp.linalg.norm(z, axis=-1, keepdims=True), 1e-8)
    sim = (zn @ zn.T) / temperature
    positives = jnp.concatenate(
        [jnp.diagonal(sim, offset=b), jnp.diagonal(sim, offset=-b)]).reshape(n, 1)
    mask = jnp.ones((n, n), dtype=bool)
    idx = jnp.arange(n)
    mask = mask.at[idx, idx].set(False)
    ib = jnp.arange(b)
    mask = mask.at[ib, b + ib].set(False)
    mask = mask.at[b + ib, ib].set(False)
    negatives = jnp.where(mask, sim, -jnp.inf)       # -inf rows drop out of logsumexp
    logits = jnp.concatenate([positives, negatives], axis=1)
    lse = jax.scipy.special.logsumexp(logits, axis=1)
    # CE with labels==0, reduction='sum', then /N
    return jnp.sum(lse - logits[:, 0]) / n


if __name__ == "__main__":
    key = jax.random.PRNGKey(0)
    k1, k2 = jax.random.split(key)

    batch_size, world_size, feat_dim = 8, 1, 32
    temperature = 0.5
    # TODO(synk): world_size > 1 would require a cross-device all-gather of z
    # before the loss; here world_size is folded into the batch dimension.
    B = batch_size * world_size

    z_i = jax.random.normal(k1, (B, feat_dim), dtype=jnp.float32)
    z_j = jax.random.normal(k2, (B, feat_dim), dtype=jnp.float32)

    loss = nt_xent_loss(z_i, z_j, temperature)
    loss = jax.block_until_ready(loss)

    ref = _nt_xent_ref(z_i, z_j, temperature)
    assert bool(jnp.isfinite(loss)), loss
    assert jnp.allclose(loss, ref, rtol=1e-4, atol=1e-4), (loss, ref)

    print("KERNEL_OK")
</pallas_src>

<mosaic_0001>
module attributes {stable_mosaic.version = 11 : i64} {
  func.func @_nt_xent_kernel(%arg0: i32, %arg1: i32, %arg2: memref<16x32xf32, #tpu.memory_space<vmem>>, %arg3: memref<128x32xf32, #tpu.memory_space<vmem>>, %arg4: memref<16x1xf32, #tpu.memory_space<vmem>>, %arg5: memref<16x1xf32, #tpu.memory_space<vmem>>, %arg6: memref<16x1xf32, #tpu.memory_space<vmem>>, %arg7: memref<16x1xf32, #tpu.memory_space<vmem>>) attributes {dimension_semantics = [#tpu.dimension_semantics<parallel>, #tpu.dimension_semantics<arbitrary>], iteration_bounds = array<i64: 1, 1>, scalar_prefetch = 0 : i64, scratch_operands = 3 : i64, tpu.core_type = #tpu.core_type<tc>, window_params = [{transform_indices = @transform_0, window_bounds = array<i64: 16, 32>}, {transform_indices = @transform_1, window_bounds = array<i64: 128, 32>}, {transform_indices = @transform_2, window_bounds = array<i64: 16, 1>}]} {
    %c0_i32 = arith.constant 0 : i32
    %0 = arith.cmpi eq, %arg1, %c0_i32 : i32
    %1 = arith.extui %0 : i1 to i32
    %c0_i32_0 = arith.constant 0 : i32
    %2 = arith.cmpi ne, %1, %c0_i32_0 : i32
    scf.if %2 {
      %cst_27 = arith.constant -1.000000e+30 : f32
      %56 = vector.broadcast %cst_27 : f32 to vector<16x1xf32>
      %c0_28 = arith.constant 0 : index
      %c0_29 = arith.constant 0 : index
      %57 = vector.load %arg5[%c0_28, %c0_29] : memref<16x1xf32, #tpu.memory_space<vmem>>, vector<16x1xf32>
      tpu.vector_store %arg5[%c0_28, %c0_29], %56 {strides = array<i32>} : memref<16x1xf32, #tpu.memory_space<vmem>>, vector<16x1xf32>,
      %cst_30 = arith.constant 0.000000e+00 : f32
      %58 = vector.broadcast %cst_30 : f32 to vector<16x1xf32>
      %c0_31 = arith.constant 0 : index
      %c0_32 = arith.constant 0 : index
      %59 = vector.load %arg6[%c0_31, %c0_32] : memref<16x1xf32, #tpu.memory_space<vmem>>, vector<16x1xf32>
      tpu.vector_store %arg6[%c0_31, %c0_32], %58 {strides = array<i32>} : memref<16x1xf32, #tpu.memory_space<vmem>>, vector<16x1xf32>,
      %cst_33 = arith.constant 0.000000e+00 : f32
      %60 = vector.broadcast %cst_33 : f32 to vector<16x1xf32>
      %c0_34 = arith.constant 0 : index
      %c0_35 = arith.constant 0 : index
      %61 = vector.load %arg7[%c0_34, %c0_35] : memref<16x1xf32, #tpu.memory_space<vmem>>, vector<16x1xf32>
      tpu.vector_store %arg7[%c0_34, %c0_35], %60 {strides = array<i32>} : memref<16x1xf32, #tpu.memory_space<vmem>>, vector<16x1xf32>,
    } else {
    }
    %c0 = arith.constant 0 : index
    %c0_1 = arith.constant 0 : index
    %3 = vector.load %arg2[%c0, %c0_1] : memref<16x32xf32, #tpu.memory_space<vmem>>, vector<16x32xf32>
    %cst = arith.constant 2.000000e+00 : f32
    %4 = vector.broadcast %cst : f32 to vector<16x32xf32>
    %5 = arith.mulf %3, %4 : vector<16x32xf32>
    %c0_2 = arith.constant 0 : index
    %c0_3 = arith.constant 0 : index
    %6 = vector.load %arg3[%c0_2, %c0_3] : memref<128x32xf32, #tpu.memory_space<vmem>>, vector<128x32xf32>
    %cst_4 = arith.constant dense<0.000000e+00> : vector<16x128xf32>
    %7 = tpu.matmul %5, %6, %cst_4 {dimension_numbers = #tpu.dot_dimension_numbers<[1], [1], [0], [0], [0, 0, 1, 0], [], []>} : vector<16x32xf32>, vector<128x32xf32>, vector<16x128xf32> -> vector<16x128xf32>
    %c16_i32 = arith.constant 16 : i32
    %8 = arith.muli %arg0, %c16_i32 : i32
    %9 = tpu.iota {dimensions = array<i32: 0>} : vector<16x128xi32>
    %10 = vector.broadcast %8 : i32 to vector<16x128xi32>
    %11 = arith.addi %10, %9 : vector<16x128xi32>
    %c128_i32 = arith.constant 128 : i32
    %12 = arith.muli %arg1, %c128_i32 : i32
    %13 = tpu.iota {dimensions = array<i32: 1>} : vector<16x128xi32>
    %14 = vector.broadcast %12 : i32 to vector<16x128xi32>
    %15 = arith.addi %14, %13 : vector<16x128xi32>
    %16 = arith.cmpi ne, %15, %11 : vector<16x128xi32>
    %c16_i32_5 = arith.constant 16 : i32
    %17 = vector.broadcast %c16_i32_5 : i32 to vector<16x128xi32>
    %18 = arith.cmpi slt, %15, %17 : vector<16x128xi32>
    %19 = arith.andi %16, %18 : vector<16x128xi1>
    %cst_6 = arith.constant -1.000000e+30 : f32
    %20 = vector.broadcast %cst_6 : f32 to vector<16x128xf32>
    %21 = arith.select %19, %7, %20 : vector<16x128xi1>, vector<16x128xf32>
    %c8_i32 = arith.constant 8 : i32
    %22 = vector.broadcast %c8_i32 : i32 to vector<16x128xi32>
    %23 = arith.cmpi slt, %11, %22 : vector<16x128xi32>
    %c8_i32_7 = arith.constant 8 : i32
    %24 = vector.broadcast %c8_i32_7 : i32 to vector<16x128xi32>
    %25 = arith.addi %11, %24 : vector<16x128xi32>
    %c8_i32_8 = arith.constant 8 : i32
    %26 = vector.broadcast %c8_i32_8 : i32 to vector<16x128xi32>
    %27 = arith.subi %11, %26 : vector<16x128xi32>
    %28 = arith.select %23, %25, %27 : vector<16x128xi1>, vector<16x128xi32>
    %c0_9 = arith.constant 0 : index
    %c0_10 = arith.constant 0 : index
    %29 = vector.load %arg7[%c0_9, %c0_10] : memref<16x1xf32, #tpu.memory_space<vmem>>, vector<16x1xf32>
    %30 = arith.cmpi eq, %15, %28 : vector<16x128xi32>
    %cst_11 = arith.constant 0.000000e+00 : f32
    %31 = vector.broadcast %cst_11 : f32 to vector<16x128xf32>
    %32 = arith.select %30, %21, %31 : vector<16x128xi1>, vector<16x128xf32>
    %cst_12 = arith.constant dense<0.000000e+00> : vector<16xf32>
    %33 = vector.multi_reduction <add>, %32, %cst_12 [1] : vector<16x128xf32> to vector<16xf32>
    %34 = vector.shape_cast %33 : vector<16xf32> to vector<16x1xf32>
    %35 = arith.addf %29, %34 : vector<16x1xf32>
    %c0_13 = arith.constant 0 : index
    %c0_14 = arith.constant 0 : index
    %36 = vector.load %arg7[%c0_13, %c0_14] : memref<16x1xf32, #tpu.memory_space<vmem>>, vector<16x1xf32>
    tpu.vector_store %arg7[%c0_13, %c0_14], %35 {strides = array<i32>} : memref<16x1xf32, #tpu.memory_space<vmem>>, vector<16x1xf32>,
    %c0_15 = arith.constant 0 : index
    %c0_16 = arith.constant 0 : index
    %37 = vector.load %arg5[%c0_15, %c0_16] : memref<16x1xf32, #tpu.memory_space<vmem>>, vector<16x1xf32>
    %cst_17 = arith.constant dense<0xFF800000> : vector<16xf32>
    %38 = vector.multi_reduction <maximumf>, %21, %cst_17 [1] : vector<16x128xf32> to vector<16xf32>
    %39 = vector.shape_cast %38 : vector<16xf32> to vector<16x1xf32>
    %40 = arith.maximumf %37, %39 : vector<16x1xf32>
    %c0_18 = arith.constant 0 : index
    %c0_19 = arith.constant 0 : index
    %41 = vector.load %arg6[%c0_18, %c0_19] : memref<16x1xf32, #tpu.memory_space<vmem>>, vector<16x1xf32>
    %42 = arith.subf %37, %40 : vector<16x1xf32>
    %43 = math.exp %42 : vector<16x1xf32>
    %44 = arith.mulf %41, %43 : vector<16x1xf32>
    %45 = vector.broadcast %40 : vector<16x1xf32> to vector<16x128xf32>
    %46 = arith.subf %21, %45 : vector<16x128xf32>
    %47 = math.exp %46 : vector<16x128xf32>
    %cst_20 = arith.constant dense<0.000000e+00> : vector<16xf32>
    %48 = vector.multi_reduction <add>, %47, %cst_20 [1] : vector<16x128xf32> to vector<16xf32>
    %49 = vector.shape_cast %48 : vector<16xf32> to vector<16x1xf32>
    %50 = arith.addf %44, %49 : vector<16x1xf32>
    %c0_21 = arith.constant 0 : index
    %c0_22 = arith.constant 0 : index
    %51 = vector.load %arg6[%c0_21, %c0_22] : memref<16x1xf32, #tpu.memory_space<vmem>>, vector<16x1xf32>
    tpu.vector_store %arg6[%c0_21, %c0_22], %50 {strides = array<i32>} : memref<16x1xf32, #tpu.memory_space<vmem>>, vector<16x1xf32>,
    %c0_23 = arith.constant 0 : index
    %c0_24 = arith.constant 0 : index
    %52 = vector.load %arg5[%c0_23, %c0_24] : memref<16x1xf32, #tpu.memory_space<vmem>>, vector<16x1xf32>
    tpu.vector_store %arg5[%c0_23, %c0_24], %40 {strides = array<i32>} : memref<16x1xf32, #tpu.memory_space<vmem>>, vector<16x1xf32>,
    %c0_i32_25 = arith.constant 0 : i32
    %53 = arith.cmpi eq, %arg1, %c0_i32_25 : i32
    %54 = arith.extui %53 : i1 to i32
    %c0_i32_26 = arith.constant 0 : i32
    %55 = arith.cmpi ne, %54, %c0_i32_26 : i32
    scf.if %55 {
      %c0_27 = arith.constant 0 : index
      %c0_28 = arith.constant 0 : index
      %56 = vector.load %arg5[%c0_27, %c0_28] : memref<16x1xf32, #tpu.memory_space<vmem>>, vector<16x1xf32>
      %c0_29 = arith.constant 0 : index
      %c0_30 = arith.constant 0 : index
      %57 = vector.load %arg6[%c0_29, %c0_30] : memref<16x1xf32, #tpu.memory_space<vmem>>, vector<16x1xf32>
      %58 = math.log %57 : vector<16x1xf32>
      %59 = arith.addf %56, %58 : vector<16x1xf32>
      %c0_31 = arith.constant 0 : index
      %c0_32 = arith.constant 0 : index
      %60 = vector.load %arg7[%c0_31, %c0_32] : memref<16x1xf32, #tpu.memory_space<vmem>>, vector<16x1xf32>
      %61 = arith.subf %59, %60 : vector<16x1xf32>
      %c0_33 = arith.constant 0 : index
      %c0_34 = arith.constant 0 : index
      %62 = vector.load %arg4[%c0_33, %c0_34] : memref<16x1xf32, #tpu.memory_space<vmem>>, vector<16x1xf32>
      tpu.vector_store %arg4[%c0_33, %c0_34], %61 {strides = array<i32>} : memref<16x1xf32, #tpu.memory_space<vmem>>, vector<16x1xf32>,
    } else {
    }
    return
  }
  func.func @transform_0(%arg0: i32, %arg1: i32) -> (i32, i32) {
    %c0_i32 = arith.constant 0 : i32
    %c0_i32_0 = arith.constant 0 : i32
    return %arg0, %c0_i32 : i32, i32
  }
  func.func @transform_1(%arg0: i32, %arg1: i32) -> (i32, i32) {
    %c0_i32 = arith.constant 0 : i32
    %c0_i32_0 = arith.constant 0 : i32
    return %arg1, %c0_i32 : i32, i32
  }
  func.func @transform_2(%arg0: i32, %arg1: i32) -> (i32, i32) {
    %c0_i32 = arith.constant 0 : i32
    %c0_i32_0 = arith.constant 0 : i32
    return %arg0, %c0_i32 : i32, i32
  }
}

</mosaic_0001>

<llo_original>
// kernel: tpu_custom_call.1
$region0: #{tpu_custom_call.1}
  #allocation0 [shape = 'u32[]', space=smem, size = 0x4, offset = 0x4, fixed_abs, tag = 'smem constant byte address 0x4 - core index']
  #allocation1 [shape = 'u32[144,128]{1,0:T(1,128)}', space=vmem, size = 0x12000, scoped, tag = 'internal scratch']
  #allocation2 [shape = 'f32[16,1]{1,0:T(8,128)}', space=vmem, size = 0x2000, scoped, tag = 'scratch operand']
  #allocation3 [shape = 'f32[16,1]{1,0:T(8,128)}', space=vmem, size = 0x2000, scoped, tag = 'scratch operand']
  #allocation4 [shape = 'f32[16,1]{1,0:T(8,128)}', space=vmem, size = 0x2000, scoped, tag = 'scratch operand']
  %s0 = inlined_call_operand.vmem [shape: f32[16,32], index: 0, kind: input, shape index: {}]
  %s1 = inlined_call_operand.vmem [shape: f32[128,32], index: 1, kind: input, shape index: {}]
  %s2 = inlined_call_operand.vmem [shape: f32[16,1], index: 2, kind: output, shape index: {}]
  %s3 = sld [smem:[#allocation0]]
  $region26: #{tpu_custom_call.1} parent=0
    _
  %s5 = ssub.s32 1, %s3
  %s6 = scalar_select 0, %s5, %s3
  // Predicated region
  $region2: #{tpu_custom_call.1} parent=0 // pred_check
    _
  $region3: #{tpu_custom_call.1} parent=0 // pred_check_branch
    %8 = sbr.rel (0) target = $region5
  $region4: #{tpu_custom_call.1} parent=0 // pred_region
    _
  $region5: #{tpu_custom_call.1} parent=0 // pred_fallthru
    _
  // Predicated region
  $region6: #{tpu_custom_call.1} parent=0 // pred_check
    _
  $region7: #{tpu_custom_call.1} parent=0 // pred_check_branch
    %10 = sbr.rel (0) target = $region9
  $region8: #{tpu_custom_call.1} parent=0 // pred_region
    _
  $region9: #{tpu_custom_call.1} parent=0 // pred_fallthru
    _
  %p11 = scmp.eq.s32.totalorder 0, 0
  // Predicated region
  $region10: #{tpu_custom_call.1} parent=0 // pred_check
    %p12 = pneg %p11
  $region11: #{tpu_custom_call.1} parent=0 // pred_check_branch
    %14 = sbr.rel (%p12) target = $region13
  $region12: #{tpu_custom_call.1} parent=0 // pred_region
    %vm15 = vcmask 7168
    %16 = vst.msk [vmem:[#allocation2] sm:$0xff] %vm15, -1e+30
    %17 = vst.msk [vmem:[#allocation2 + $0x8] sm:$0xff] %vm15, -1e+30
    %18 = vst.msk [vmem:[#allocation3] sm:$0xff] %vm15, 0.0
    %19 = vst.msk [vmem:[#allocation3 + $0x8] sm:$0xff] %vm15, 0.0
    %20 = vst.msk [vmem:[#allocation4] sm:$0xff] %vm15, 0.0
    %21 = vst.msk [vmem:[#allocation4 + $0x8] sm:$0xff] %vm15, 0.0
  $region13: #{tpu_custom_call.1} parent=0 // pred_fallthru
    _
  %v22 = vld [vmem:[%s0] sm:$0xff]
  %v23 = vld [vmem:[%s0 + $0x8] sm:$0xff]
  %v24 = vmul.f32 %v22, 2.0
  %v25 = vmul.f32 %v23, 2.0
  %v26 = vld [vmem:[%s1] sm:$0xff]
  %v27 = vld [vmem:[%s1 + $0x8] sm:$0xff]
  %v28 = vld [vmem:[%s1 + $0x10] sm:$0xff]
  %v29 = vld [vmem:[%s1 + $0x18] sm:$0xff]
  %v30 = vld [vmem:[%s1 + $0x20] sm:$0xff]
  %v31 = vld [vmem:[%s1 + $0x28] sm:$0xff]
  %v32 = vld [vmem:[%s1 + $0x30] sm:$0xff]
  %v33 = vld [vmem:[%s1 + $0x38] sm:$0xff]
  %v34 = vld [vmem:[%s1 + $0x40] sm:$0xff]
  %v35 = vld [vmem:[%s1 + $0x48] sm:$0xff]
  %v36 = vld [vmem:[%s1 + $0x50] sm:$0xff]
  %v37 = vld [vmem:[%s1 + $0x58] sm:$0xff]
  %v38 = vld [vmem:[%s1 + $0x60] sm:$0xff]
  %v39 = vld [vmem:[%s1 + $0x68] sm:$0xff]
  %v40 = vld [vmem:[%s1 + $0x70] sm:$0xff]
  %v41 = vld [vmem:[%s1 + $0x78] sm:$0xff]
  %vm42 = vcmask 261120
  %v44 = vsel %vm42, %v24, 0
  %v47 = vsel %vm42, %v25, 0
  %v50 = vsel %vm42, %v26, 0
  %v53 = vsel %vm42, %v27, 0
  %v56 = vsel %vm42, %v28, 0
  %v59 = vsel %vm42, %v29, 0
  %v62 = vsel %vm42, %v30, 0
  %v65 = vsel %vm42, %v31, 0
  %v68 = vsel %vm42, %v32, 0
  %v71 = vsel %vm42, %v33, 0
  %v74 = vsel %vm42, %v34, 0
  %v77 = vsel %vm42, %v35, 0
  %v80 = vsel %vm42, %v36, 0
  %v83 = vsel %vm42, %v37, 0
  %v86 = vsel %vm42, %v38, 0
  %v89 = vsel %vm42, %v39, 0
  %v92 = vsel %vm42, %v40, 0
  %v95 = vsel %vm42, %v41, 0
  %97 = vmatprep.subr.mxu0 0.0
  %98 = vmatpush1.xpose.msra.mxu0 %v95
  %99 = vmatprep.subr.mxu0 0.0
  %100 = vmatpush1.xpose.msra.mxu0 %v92
  %101 = vmatprep.subr.mxu0 0.0
  %102 = vmatpush1.xpose.msra.mxu0 %v89
  %103 = vmatprep.subr.mxu0 0.0
  %104 = vmatpush1.xpose.msra.mxu0 %v86
  %105 = vmatprep.subr.mxu0 0.0
  %106 = vmatpush1.xpose.msra.mxu0 %v83
  %107 = vmatprep.subr.mxu0 0.0
  %108 = vmatpush1.xpose.msra.mxu0 %v80
  %109 = vmatprep.subr.mxu0 0.0
  %110 = vmatpush1.xpose.msra.mxu0 %v77
  %111 = vmatprep.subr.mxu0 0.0
  %112 = vmatpush1.xpose.msra.mxu0 %v74
  %113 = vmatprep.subr.mxu0 0.0
  %114 = vmatpush1.xpose.msra.mxu0 %v71
  %115 = vmatprep.subr.mxu0 0.0
  %116 = vmatpush1.xpose.msra.mxu0 %v68
  %117 = vmatprep.subr.mxu0 0.0
  %118 = vmatpush1.xpose.msra.mxu0 %v65
  %119 = vmatprep.subr.mxu0 0.0
  %120 = vmatpush1.xpose.msra.mxu0 %v62
  %121 = vmatprep.subr.mxu0 0.0
  %122 = vmatpush1.xpose.msra.mxu0 %v59
  %123 = vmatprep.subr.mxu0 0.0
  %124 = vmatpush1.xpose.msra.mxu0 %v56
  %125 = vmatprep.subr.mxu0 0.0
  %126 = vmatpush1.xpose.msra.mxu0 %v53
  %127 = vmatprep.subr.mxu0 0.0
  %128 = vmatpush1.xpose.msra.mxu0 %v50
  %129 = vmatprep.subr.mxu0 0.0
  %130 = vmatpush2.xpose.msra.mxu0 0.0
  %131 = vmatprep.subr.mxu0 0.0
  %132 = vmatpush2.xpose.msra.mxu0 0.0
  %133 = vmatprep.subr.mxu0 0.0
  %134 = vmatpush2.xpose.msra.mxu0 0.0
  %135 = vmatprep.subr.mxu0 0.0
  %136 = vmatpush2.xpose.msra.mxu0 0.0
  %137 = vmatprep.subr.mxu0 0.0
  %138 = vmatpush2.xpose.msra.mxu0 0.0
  %139 = vmatprep.subr.mxu0 0.0
  %140 = vmatpush2.xpose.msra.mxu0 0.0
  %141 = vmatprep.subr.mxu0 0.0
  %142 = vmatpush2.xpose.msra.mxu0 0.0
  %143 = vmatprep.subr.mxu0 0.0
  %144 = vmatpush2.xpose.msra.mxu0 0.0
  %145 = vmatprep.subr.mxu0 0.0
  %146 = vmatpush2.xpose.msra.mxu0 0.0
  %147 = vmatprep.subr.mxu0 0.0
  %148 = vmatpush2.xpose.msra.mxu0 0.0
  %149 = vmatprep.subr.mxu0 0.0
  %150 = vmatpush2.xpose.msra.mxu0 0.0
  %151 = vmatprep.subr.mxu0 0.0
  %152 = vmatpush2.xpose.msra.mxu0 0.0
  %153 = vmatprep.subr.mxu0 0.0
  %154 = vmatpush2.xpose.msra.mxu0 0.0
  %155 = vmatprep.subr.mxu0 0.0
  %156 = vmatpush2.xpose.msra.mxu0 0.0
  %157 = vmatprep.subr.mxu0 0.0
  %158 = vmatpush2.xpose.msra.mxu0 0.0
  %159 = vmatprep.subr.mxu0 0.0
  %160 = vmatpush2.xpose.msra.mxu0 0.0
  %161 = vmatprep.mubr.f32.mxu0 0.0
  %162 = vmatmul.mubr.f32.gmra.mxu0 %v44
  %v163 = vpop.f32.mrf.mxu0
  %v164 = vadd.f32 0.0, %v163
  %v165 = vpop.f32.mrf.mxu0
  %166 = vmatprep.mubr.f32.mxu0 0.0
  %167 = vmatmul.mubr.f32.gmra.mxu0 %v47
  %v168 = vpop.f32.mrf.mxu0
  %v169 = vadd.f32 0.0, %v168
  %v170 = vpop.f32.mrf.mxu0
  %171 = vdwg.mxu0
  %s172 = smul.u32 0, 16
  %v173 = vlaneseq
  %v174 = vshrl.u32 %v173, 7
  %v175 = vadd.s32 %v174, 8
  %v176 = vstv %s172
  %v177 = vadd.s32 %v176, %v174
  %v178 = vadd.s32 %v176, %v175
  %s179 = smul.u32 0, 128
  %v180 = vlaneseq
  %v181 = vand.u32 %v180, 127
  %v182 = vstv %s179
  %v183 = vadd.s32 %v182, %v181
  %vm184 = vcmp.ne.s32.totalorder %v183, %v177
  %vm185 = vcmp.ne.s32.totalorder %v183, %v178
  %vm186 = vcmp.lt.s32.totalorder %v183, 16
  %vm187 = vmand %vm184, %vm186
  %vm188 = vmand %vm185, %vm186
  %v189 = vsel %vm187, %v164, -1e+30
  %v190 = vsel %vm188, %v169, -1e+30
  %vm191 = vcmp.lt.s32.totalorder %v177, 8
  %vm192 = vcmp.lt.s32.totalorder %v178, 8
  %v193 = vadd.s32 %v177, 8
  %v194 = vadd.s32 %v178, 8
  %v195 = vsub.s32 %v177, 8
  %v196 = vsub.s32 %v178, 8
  %v197 = vsel %vm191, %v193, %v195
  %v198 = vsel %vm192, %v194, %v196
  %v199 = vld [vmem:[#allocation4] sm:$0xff]
  %v200 = vld [vmem:[#allocation4 + $0x8] sm:$0xff]
  %vm201 = vcmp.eq.s32.totalorder %v183, %v197
  %vm202 = vcmp.eq.s32.totalorder %v183, %v198
  %v203 = vsel %vm201, %v189, 0.0
  %v204 = vsel %vm202, %v190, 0.0
  %205 = vadd.xlane.f32.xlu0 %v203
  %v206 = vpop.xlane.xlu0 %205
  %207 = vadd.xlane.f32.xlu0 %v204
  %v208 = vpop.xlane.xlu0 %207
  %v209 = vadd.f32 %v199, %v206
  %v210 = vadd.f32 %v200, %v208
  %vm211 = vcmask 7168
  %212 = vst.msk [vmem:[#allocation4] sm:$0xff] %vm211, %v209
  %213 = vst.msk [vmem:[#allocation4 + $0x8] sm:$0xff] %vm211, %v210
  %v214 = vld [vmem:[#allocation2] sm:$0xff]
  %v215 = vld [vmem:[#allocation2 + $0x8] sm:$0xff]
  %216 = vmax.xlane.f32.xlu0 %v189
  %v217 = vpop.xlane.xlu0 %216
  %218 = vmax.xlane.f32.xlu0 %v190
  %v219 = vpop.xlane.xlu0 %218
  %v220 = vmax.f32 %v214, %v217
  %v221 = vmax.f32 %v215, %v219
  %v222 = vld [vmem:[#allocation3] sm:$0xff]
  %v223 = vld [vmem:[#allocation3 + $0x8] sm:$0xff]
  %v224 = vsub.f32 %v214, %v220
  %v225 = vsub.f32 %v215, %v221
  %v226 = vmul.f32 %v224, 1.442695
  %v227 = vpow.pop %v226
  %v228 = vmul.f32 %v225, 1.442695
  %v229 = vpow.pop %v228
  %v230 = vmul.f32 %v222, %v227
  %v231 = vmul.f32 %v223, %v229
  %233 = vset.pattern.permute.xlu0 0
  %234 = vperm.xlu0 %233, %v220
  %v235 = vpop.permute.xlu0 %234
  %238 = vset.pattern.permute.xlu0 0
  %239 = vperm.xlu0 %238, %v221
  %v240 = vpop.permute.xlu0 %239
  %v242 = vsub.f32 %v189, %v235
  %v243 = vsub.f32 %v190, %v240
  %v244 = vmul.f32 %v242, 1.442695
  %v245 = vpow.pop %v244
  %v246 = vmul.f32 %v243, 1.442695
  %v247 = vpow.pop %v246
  %248 = vadd.xlane.f32.xlu0 %v245
  %v249 = vpop.xlane.xlu0 %248
  %250 = vadd.xlane.f32.xlu0 %v247
  %v251 = vpop.xlane.xlu0 %250
  %v252 = vadd.f32 %v230, %v249
  %v253 = vadd.f32 %v231, %v251
  %254 = vst.msk [vmem:[#allocation3] sm:$0xff] %vm211, %v252
  %255 = vst.msk [vmem:[#allocation3 + $0x8] sm:$0xff] %vm211, %v253
  %256 = vst.msk [vmem:[#allocation2] sm:$0xff] %vm211, %v220
  %257 = vst.msk [vmem:[#allocation2 + $0x8] sm:$0xff] %vm211, %v221
  // Predicated region
  $region14: #{tpu_custom_call.1} parent=0 // pred_check
    %p258 = pneg %p11
  $region15: #{tpu_custom_call.1} parent=0 // pred_check_branch
    %260 = sbr.rel (%p258) target = $region17
  $region16: #{tpu_custom_call.1} parent=0 // pred_region
    %v261 = vld [vmem:[#allocation2] sm:$0xff]
    %v262 = vld [vmem:[#allocation2 + $0x8] sm:$0xff]
    %v263 = vld [vmem:[#allocation3] sm:$0xff]
    %v264 = vld [vmem:[#allocation3 + $0x8] sm:$0xff]
    %v265 = vlog2.pop %v263
    %v266 = vmul.f32 %v265, 0.6931472
    %v267 = vlog2.pop %v264
    %v268 = vmul.f32 %v267, 0.6931472
    %v269 = vadd.f32 %v261, %v266
    %v270 = vadd.f32 %v262, %v268
    %v271 = vld [vmem:[#allocation4] sm:$0xff]
    %v272 = vld [vmem:[#allocation4 + $0x8] sm:$0xff]
    %v273 = vsub.f32 %v269, %v271
    %v274 = vsub.f32 %v270, %v272
    %275 = vst.msk [vmem:[%s2] sm:$0xff] %vm211, %v273
    %276 = vst.msk [vmem:[%s2 + $0x8] sm:$0xff] %vm211, %v274
  $region17: #{tpu_custom_call.1} parent=0 // pred_fallthru
    _
  // Predicated region
  $region18: #{tpu_custom_call.1} parent=0 // pred_check
    _
  $region19: #{tpu_custom_call.1} parent=0 // pred_check_branch
    %278 = sbr.rel (0) target = $region21
  $region20: #{tpu_custom_call.1} parent=0 // pred_region
    _
  $region21: #{tpu_custom_call.1} parent=0 // pred_fallthru
    _
  // Predicated region
  $region22: #{tpu_custom_call.1} parent=0 // pred_check
    _
  $region23: #{tpu_custom_call.1} parent=0 // pred_check_branch
    %280 = sbr.rel (0) target = $region25
  $region24: #{tpu_custom_call.1} parent=0 // pred_region
    _
  $region25: #{tpu_custom_call.1} parent=0 // pred_fallthru
    _

</llo_original>
